<compile_context>
chip_gen: v7x
topology: tpu7x:2x2x1
jax: 0.10.0
libtpu: 0.0.40
codegen_flags: <defaults>
</compile_context>

<pallas_src>
import functools

import jax
import jax.numpy as jnp
from jax.experimental import pallas as pl
from jax.experimental.pallas import tpu as pltpu


def _round_up(a, b):
    return (a + b - 1) // b * b


def _binary_linear_kernel(x_ref, w_ref, b_ref, o_ref, acc_ref):
    # x_ref: (tm, tk) f32   raw input tile
    # w_ref: (tk, tn) bf16  pre-binarized (+/-1, zero-padded) weight tile
    # b_ref: (1,  tn) f32   bias tile
    # o_ref: (tm, tn) f32   output tile (resident across the K axis)
    # acc_ref: (tm, tn) f32 VMEM accumulator scratch
    k = pl.program_id(2)

    @pl.when(k == 0)
    def _():
        acc_ref[...] = jnp.zeros_like(acc_ref)

    # Binarize the input on the VPU (strict > 0, matching torch.where), feed
    # the MXU with bf16 operands and accumulate exactly in f32.
    bx = jnp.where(x_ref[...] > 0, 1.0, -1.0).astype(jnp.bfloat16)
    acc_ref[...] += jnp.dot(bx, w_ref[...], preferred_element_type=jnp.float32)

    @pl.when(k == pl.num_programs(2) - 1)
    def _():
        o_ref[...] = (acc_ref[...] + b_ref[...]).astype(o_ref.dtype)


@functools.partial(jax.jit, static_argnames=("tm", "tn", "tk"))
def binary_linear(x, weight, bias, *, tm=None, tn=None, tk=None):
    """x: (M, K) f32, weight: (N, K) f32, bias: (N,) f32 -> (M, N) f32."""
    M, K = x.shape
    N, K2 = weight.shape
    assert K == K2 and bias.shape == (N,)

    # Pre-binarize + pre-transpose the weight outside the kernel.
    # +/-1 is exact in bf16; padded rows/cols are 0 so they contribute nothing.
    w_bin = jnp.where(weight > 0, 1.0, -1.0).astype(jnp.bfloat16).T  # (K, N)

    # Tile defaults: MXU/lane-aligned, sized well under the scoped VMEM limit
    # on every generation (incl. v7x's 64 MiB physical VMEM).
    if tm is None:
        tm = 128 if M >= 128 else _round_up(M, 8)
    if tn is None:
        tn = 256 if N >= 256 else _round_up(N, 128)
    if tk is None:
        tk = 512 if K >= 512 else _round_up(K, 128)

    M_pad = _round_up(M, tm)
    N_pad = _round_up(N, tn)
    K_pad = _round_up(K, tk)

    x_p = jnp.pad(x, ((0, M_pad - M), (0, K_pad - K)))
    w_p = jnp.pad(w_bin, ((0, K_pad - K), (0, N_pad - N)))
    b_p = jnp.pad(bias.astype(jnp.float32), (0, N_pad - N)).reshape(1, N_pad)

    grid = (M_pad // tm, N_pad // tn, K_pad // tk)

    out = pl.pallas_call(
        _binary_linear_kernel,
        out_shape=jax.ShapeDtypeStruct((M_pad, N_pad), jnp.float32),
        grid_spec=pltpu.PrefetchScalarGridSpec(
            num_scalar_prefetch=0,
            grid=grid,
            in_specs=[
                pl.BlockSpec((tm, tk), lambda i, j, k: (i, k)),   # x tile
                pl.BlockSpec((tk, tn), lambda i, j, k: (k, j)),   # binarized W^T tile
                pl.BlockSpec((1, tn), lambda i, j, k: (0, j)),    # bias tile
            ],
            out_specs=pl.BlockSpec((tm, tn), lambda i, j, k: (i, j)),
            scratch_shapes=[pltpu.VMEM((tm, tn), jnp.float32)],
        ),
        compiler_params=pltpu.CompilerParams(
            dimension_semantics=("parallel", "parallel", "arbitrary"),
            vmem_limit_bytes=32 * 1024 * 1024,
        ),
    )(x_p, w_p, b_p)

    return out[:M, :N]


def binary_linear_ref(x, weight, bias):
    bx = jnp.where(x > 0, 1.0, -1.0)
    bw = jnp.where(weight > 0, 1.0, -1.0)
    return bx @ bw.T + bias[None, :]


if __name__ == "__main__":
    batch = 8
    in_features = 512
    out_features = 256

    key = jax.random.PRNGKey(0)
    kx, kw, kb = jax.random.split(key, 3)

    x = jax.random.normal(kx, (batch, in_features), dtype=jnp.float32)
    bound = 1.0 / (in_features ** 0.5)
    weight = jax.random.uniform(
        kw, (out_features, in_features), minval=-bound, maxval=bound, dtype=jnp.float32
    )
    bias = jax.random.uniform(
        kb, (out_features,), minval=-bound, maxval=bound, dtype=jnp.float32
    )

    ref = binary_linear_ref(x, weight, bias)

    # Small explicit tiles -> grid (1, 2, 2): exercises the K accumulator,
    # N tiling, and the bias-add finalize path.
    out = binary_linear(x, weight, bias, tm=8, tn=128, tk=256)
    out = jax.block_until_ready(out)
    assert out.shape == (batch, out_features)
    assert jnp.allclose(out, ref, atol=1e-4, rtol=1e-4), "mismatch vs reference (tiled)"

    # Default tile-selection path (single-block grid at these small shapes).
    out2 = jax.block_until_ready(binary_linear(x, weight, bias))
    assert jnp.allclose(out2, ref, atol=1e-4, rtol=1e-4), "mismatch vs reference (defaults)"

    print("KERNEL_OK")
</pallas_src>

<mosaic_0001>
module attributes {stable_mosaic.version = 11 : i64} {
  func.func @_binary_linear_kernel(%arg0: i32, %arg1: i32, %arg2: i32, %arg3: memref<8x256xf32, #tpu.memory_space<vmem>>, %arg4: memref<256x128xbf16, #tpu.memory_space<vmem>>, %arg5: memref<1x128xf32, #tpu.memory_space<vmem>>, %arg6: memref<8x128xf32, #tpu.memory_space<vmem>>, %arg7: memref<8x128xf32, #tpu.memory_space<vmem>>) attributes {dimension_semantics = [#tpu.dimension_semantics<parallel>, #tpu.dimension_semantics<parallel>, #tpu.dimension_semantics<arbitrary>], iteration_bounds = array<i64: 1, 2, 2>, scalar_prefetch = 0 : i64, scratch_operands = 1 : i64, tpu.core_type = #tpu.core_type<tc>, window_params = [{transform_indices = @transform_0, window_bounds = array<i64: 8, 256>}, {transform_indices = @transform_1, window_bounds = array<i64: 256, 128>}, {transform_indices = @transform_2, window_bounds = array<i64: 1, 128>}, {transform_indices = @transform_3, window_bounds = array<i64: 8, 128>}]} {
    %c0_i32 = arith.constant 0 : i32
    %0 = arith.cmpi eq, %arg2, %c0_i32 : i32
    %1 = arith.extui %0 : i1 to i32
    %c0_i32_0 = arith.constant 0 : i32
    %2 = arith.cmpi ne, %1, %c0_i32_0 : i32
    scf.if %2 {
      %cst_12 = arith.constant 0.000000e+00 : f32
      %18 = vector.broadcast %cst_12 : f32 to vector<8x128xf32>
      %c0_13 = arith.constant 0 : index
      %c0_14 = arith.constant 0 : index
      %19 = vector.load %arg7[%c0_13, %c0_14] : memref<8x128xf32, #tpu.memory_space<vmem>>, vector<8x128xf32>
      tpu.vector_store %arg7[%c0_13, %c0_14], %18 {strides = array<i32>} : memref<8x128xf32, #tpu.memory_space<vmem>>, vector<8x128xf32>,
    } else {
    }
    %c0 = arith.constant 0 : index
    %c0_1 = arith.constant 0 : index
    %3 = vector.load %arg3[%c0, %c0_1] : memref<8x256xf32, #tpu.memory_space<vmem>>, vector<8x256xf32>
    %cst = arith.constant 0.000000e+00 : f32
    %4 = vector.broadcast %cst : f32 to vector<8x256xf32>
    %5 = arith.cmpf ogt, %3, %4 : vector<8x256xf32>
    %cst_2 = arith.constant 1.000000e+00 : f32
    %cst_3 = arith.constant -1.000000e+00 : f32
    %6 = vector.broadcast %cst_2 : f32 to vector<8x256xf32>
    %7 = vector.broadcast %cst_3 : f32 to vector<8x256xf32>
    %8 = arith.select %5, %6, %7 : vector<8x256xi1>, vector<8x256xf32>
    %9 = arith.truncf %8 : vector<8x256xf32> to vector<8x256xbf16>
    %c0_4 = arith.constant 0 : index
    %c0_5 = arith.constant 0 : index
    %10 = vector.load %arg7[%c0_4, %c0_5] : memref<8x128xf32, #tpu.memory_space<vmem>>, vector<8x128xf32>
    %c0_6 = arith.constant 0 : index
    %c0_7 = arith.constant 0 : index
    %11 = vector.load %arg4[%c0_6, %c0_7] : memref<256x128xbf16, #tpu.memory_space<vmem>>, vector<256x128xbf16>
    %cst_8 = arith.constant dense<0.000000e+00> : vector<8x128xf32>
    %12 = tpu.matmul %9, %11, %cst_8 {dimension_numbers = #tpu.dot_dimension_numbers<[1], [0], [0], [1], [0, 0, 1, 1], [], []>} : vector<8x256xbf16>, vector<256x128xbf16>, vector<8x128xf32> -> vector<8x128xf32>
    %13 = arith.addf %10, %12 : vector<8x128xf32>
    %c0_9 = arith.constant 0 : index
    %c0_10 = arith.constant 0 : index
    %14 = vector.load %arg7[%c0_9, %c0_10] : memref<8x128xf32, #tpu.memory_space<vmem>>, vector<8x128xf32>
    tpu.vector_store %arg7[%c0_9, %c0_10], %13 {strides = array<i32>} : memref<8x128xf32, #tpu.memory_space<vmem>>, vector<8x128xf32>,
    %c1_i32 = arith.constant 1 : i32
    %15 = arith.cmpi eq, %arg2, %c1_i32 : i32
    %16 = arith.extui %15 : i1 to i32
    %c0_i32_11 = arith.constant 0 : i32
    %17 = arith.cmpi ne, %16, %c0_i32_11 : i32
    scf.if %17 {
      %c0_12 = arith.constant 0 : index
      %c0_13 = arith.constant 0 : index
      %18 = vector.load %arg7[%c0_12, %c0_13] : memref<8x128xf32, #tpu.memory_space<vmem>>, vector<8x128xf32>
      %c0_14 = arith.constant 0 : index
      %c0_15 = arith.constant 0 : index
      %19 = vector.load %arg5[%c0_14, %c0_15] : memref<1x128xf32, #tpu.memory_space<vmem>>, vector<1x128xf32>
      %20 = vector.broadcast %19 : vector<1x128xf32> to vector<8x128xf32>
      %21 = arith.addf %18, %20 : vector<8x128xf32>
      %c0_16 = arith.constant 0 : index
      %c0_17 = arith.constant 0 : index
      %22 = vector.load %arg6[%c0_16, %c0_17] : memref<8x128xf32, #tpu.memory_space<vmem>>, vector<8x128xf32>
      tpu.vector_store %arg6[%c0_16, %c0_17], %21 {strides = array<i32>} : memref<8x128xf32, #tpu.memory_space<vmem>>, vector<8x128xf32>,
    } else {
    }
    return
  }
  func.func @transform_0(%arg0: i32, %arg1: i32, %arg2: i32) -> (i32, i32) {
    %c0_i32 = arith.constant 0 : i32
    return %arg0, %arg2 : i32, i32
  }
  func.func @transform_1(%arg0: i32, %arg1: i32, %arg2: i32) -> (i32, i32) {
    %c0_i32 = arith.constant 0 : i32
    return %arg2, %arg1 : i32, i32
  }
  func.func @transform_2(%arg0: i32, %arg1: i32, %arg2: i32) -> (i32, i32) {
    %c0_i32 = arith.constant 0 : i32
    %c0_i32_0 = arith.constant 0 : i32
    return %c0_i32, %arg1 : i32, i32
  }
  func.func @transform_3(%arg0: i32, %arg1: i32, %arg2: i32) -> (i32, i32) {
    %c0_i32 = arith.constant 0 : i32
    return %arg0, %arg1 : i32, i32
  }
}

</mosaic_0001>

<llo_original>
// kernel: binary_linear.1
$region0: #{binary_linear.1}
  #allocation0 [shape = 'u32[]', space=smem, size = 0x4, offset = 0x4, fixed_abs, tag = 'smem constant byte address 0x4 - core index']
  #allocation1 [shape = 'u32[144,128]{1,0:T(1,128)}', space=vmem, size = 0x12000, scoped, tag = 'internal scratch']
  #allocation2 [shape = 'f32[8,128]{1,0:T(8,128)}', space=vmem, size = 0x1000, scoped, tag = 'scratch operand']
  %s0 = inlined_call_operand.vmem [shape: f32[8,512], index: 0, kind: input, shape index: {}]
  %s1 = inlined_call_operand.vmem [shape: bf16[512,256], index: 1, kind: input, shape index: {}]
  %s2 = inlined_call_operand.vmem [shape: f32[1,256], index: 2, kind: input, shape index: {}]
  %s3 = inlined_call_operand.hbm [shape: f32[8,256], index: 3, kind: output, shape index: {}]
  %s4 = sld [smem:[#allocation0]]
  $region94: #{binary_linear.1} parent=0
    _
  %s6 = ssub.s32 1, %s4
  %s7 = scalar_select 0, %s6, %s4
  $region1: #{binary_linear.1} parent=0
    #allocation3 [shape = 'u8[131072]{0}', space=vmem, size = 0x20000, scoped, tag = 'input window, operand 1']
    #allocation4 [shape = 'u8[8192]{0}', space=vmem, size = 0x2000, scoped, tag = 'output window, operand 0']
    #allocation5 [shape = 's32[2]{0}', space=sflag, size = 0x8, scoped, tag = 'scoped memory for binary_linear.1']
    %8 = vsyncpa [#allocation5], 0
    %s9 = scalar_lea.sflag [#allocation5], 1
    %10 = vsyncpa %s9, 0
    loop: start=0, step=1, limit=6
    $region2: #{binary_linear.1} parent=1 // loop_pre_header
      _
    $region3: #{binary_linear.1} parent=1 // loop_header
      %s12 = sphi 0, %s16
      %p13 = scmp.ge.s32.totalorder %s12, 6
      %s19 = sphi 0, %s38
      %s20 = sphi 0, %s34
      %s21 = sphi 0, %s30
      %s22 = sphi 0, %s19
      %s23 = sphi 0, %s20
      %s24 = sphi 0, %s21
      %s25 = sphi 0, %s22
      %s26 = sphi 0, %s23
      %s27 = sphi 0, %s24
      %s43 = sphi 0, %s45
      %s46 = sphi 0, %s43
      %s47 = sphi 0, %s46
      %s63 = sphi 0, %s47
      %s71 = sphi 0, %s73
      %s74 = sphi 0, %s71
      %s75 = sphi 0, %s74
      %s91 = sphi 0, %s75
      %s97 = sphi 0, %s99
      %s100 = sphi 0, %s97
      %s101 = sphi 0, %s100
      %s117 = sphi 0, %s101
      %s125 = sphi 0, %s127
      %s128 = sphi 0, %s125
      %s129 = sphi 0, %s128
      %s145 = sphi 0, %s129
    $region4: #{binary_linear.1} parent=1 // loop_header_branch
      %15 = sbr.rel (%p13) target = $region8
    $region5: #{binary_linear.1} parent=1 // loop_body
      %s17 = ssub.s32 %s12, 1
      %s18 = ssub.s32 %s12, 2
      %s28 = sadd.s32 1, %s21
      %p29 = scmp.ge.s32.totalorder %s28, 2
      %s30 = scalar_select %p29, 0, %s28
      %s31 = sadd.s32 1, %s20
      %s32 = scalar_select %p29, %s31, %s20
      %p33 = scmp.ge.s32.totalorder %s32, 2
      %s34 = scalar_select %p33, 0, %s32
      %s35 = sadd.s32 1, %s19
      %s36 = scalar_select %p33, %s35, %s19
      %p37 = scmp.ge.s32.totalorder %s36, 1
      %s38 = scalar_select %p37, 0, %s36
      %s39 = ssub.s32 %s19, %s38
      %s40 = ssub.s32 %s21, %s30
      %s41 = sor.u32 %s39, %s40
      %p42 = scmp.eq.s32.totalorder %s41, 0
      %s44 = sadd.s32 %s43, 1
      %s45 = scalar_select %p42, %s43, %s44
      %p48 = pneg %p42
      %p49 = scmp.eq.s32.totalorder %s12, 3
      %p50 = por %p48, %p49
      %p51 = scmp.ne.s32.totalorder %s43, %s46
      %p52 = scmp.eq.s32.totalorder %s12, 0
      %p53 = por %p51, %p52
      %p54 = scmp.ne.s32.totalorder %s43, %s46
      %p55 = scmp.eq.s32.totalorder %s17, 3
      %p56 = por %p54, %p55
      %p57 = scmp.ne.s32.totalorder %s46, %s47
      %p58 = scmp.eq.s32.totalorder %s17, 0
      %p59 = por %p57, %p58
      %p60 = scmp.ne.s32.totalorder %s46, %s47
      %p61 = scmp.eq.s32.totalorder %s18, 3
      %p62 = por %p60, %p61
      %p64 = scmp.ne.s32.totalorder %s47, %s63
      %p65 = scmp.eq.s32.totalorder %s18, 0
      %p66 = por %p64, %p65
      %s67 = ssub.s32 %s21, %s30
      %s68 = ssub.s32 %s20, %s34
      %s69 = sor.u32 %s67, %s68
      %p70 = scmp.eq.s32.totalorder %s69, 0
      %s72 = sadd.s32 %s71, 1
      %s73 = scalar_select %p70, %s71, %s72
      %p76 = pneg %p70
      %p77 = scmp.eq.s32.totalorder %s12, 3
      %p78 = por %p76, %p77
      %p79 = scmp.ne.s32.totalorder %s71, %s74
      %p80 = scmp.eq.s32.totalorder %s12, 0
      %p81 = por %p79, %p80
      %p82 = scmp.ne.s32.totalorder %s71, %s74
      %p83 = scmp.eq.s32.totalorder %s17, 3
      %p84 = por %p82, %p83
      %p85 = scmp.ne.s32.totalorder %s74, %s75
      %p86 = scmp.eq.s32.totalorder %s17, 0
      %p87 = por %p85, %p86
      %p88 = scmp.ne.s32.totalorder %s74, %s75
      %p89 = scmp.eq.s32.totalorder %s18, 3
      %p90 = por %p88, %p89
      %p92 = scmp.ne.s32.totalorder %s75, %s91
      %p93 = scmp.eq.s32.totalorder %s18, 0
      %p94 = por %p92, %p93
      %s95 = ssub.s32 %s20, %s34
      %p96 = scmp.eq.s32.totalorder %s95, 0
      %s98 = sadd.s32 %s97, 1
      %s99 = scalar_select %p96, %s97, %s98
      %p102 = pneg %p96
      %p103 = scmp.eq.s32.totalorder %s12, 3
      %p104 = por %p102, %p103
      %p105 = scmp.ne.s32.totalorder %s97, %s100
      %p106 = scmp.eq.s32.totalorder %s12, 0
      %p107 = por %p105, %p106
      %p108 = scmp.ne.s32.totalorder %s97, %s100
      %p109 = scmp.eq.s32.totalorder %s17, 3
      %p110 = por %p108, %p109
      %p111 = scmp.ne.s32.totalorder %s100, %s101
      %p112 = scmp.eq.s32.totalorder %s17, 0
      %p113 = por %p111, %p112
      %p114 = scmp.ne.s32.totalorder %s100, %s101
      %p115 = scmp.eq.s32.totalorder %s18, 3
      %p116 = por %p114, %p115
      %p118 = scmp.ne.s32.totalorder %s101, %s117
      %p119 = scmp.eq.s32.totalorder %s18, 0
      %p120 = por %p118, %p119
      %s121 = ssub.s32 %s19, %s38
      %s122 = ssub.s32 %s20, %s34
      %s123 = sor.u32 %s121, %s122
      %p124 = scmp.eq.s32.totalorder %s123, 0
      %s126 = sadd.s32 %s125, 1
      %s127 = scalar_select %p124, %s125, %s126
      %p130 = pneg %p124
      %p131 = scmp.eq.s32.totalorder %s12, 3
      %p132 = por %p130, %p131
      %p133 = scmp.ne.s32.totalorder %s125, %s128
      %p134 = scmp.eq.s32.totalorder %s12, 0
      %p135 = por %p133, %p134
      %p136 = scmp.ne.s32.totalorder %s125, %s128
      %p137 = scmp.eq.s32.totalorder %s17, 3
      %p138 = por %p136, %p137
      %p139 = scmp.ne.s32.totalorder %s128, %s129
      %p140 = scmp.eq.s32.totalorder %s17, 0
      %p141 = por %p139, %p140
      %p142 = scmp.ne.s32.totalorder %s128, %s129
      %p143 = scmp.eq.s32.totalorder %s18, 3
      %p144 = por %p142, %p143
      %p146 = scmp.ne.s32.totalorder %s129, %s145
      %p147 = scmp.eq.s32.totalorder %s18, 0
      %p148 = por %p146, %p147
      %p149 = scmp.le.s32.totalorder 1, %s12
      %p150 = scmp.lt.s32.totalorder %s12, 5
      %p151 = pnand %p149, %p150
      %p152 = pneg %p151
      // Predicated region
      $region9: #{binary_linear.1} parent=5 // pred_check
        _
      $region10: #{binary_linear.1} parent=5 // pred_check_branch
        %154 = sbr.rel (%p151) target = $region12
      $region11: #{binary_linear.1} parent=5 // pred_region
        %s155 = ssub.s32 %s12, 1
      $region12: #{binary_linear.1} parent=5 // pred_fallthru
        _
      %p156 = scmp.lt.s32.totalorder %s12, 4
      // Predicated region
      $region13: #{binary_linear.1} parent=5 // pred_check
        %p157 = pneg %p156
      $region14: #{binary_linear.1} parent=5 // pred_check_branch
        %159 = sbr.rel (%p157) target = $region16
      $region15: #{binary_linear.1} parent=5 // pred_region
        // Predicated region
        $region17: #{binary_linear.1} parent=15 // pred_check
          %p160 = pneg %p53
        $region18: #{binary_linear.1} parent=15 // pred_check_branch
          %162 = sbr.rel (%p160) target = $region20
        $region19: #{binary_linear.1} parent=15 // pred_region
          %s163 = smul.u32 2, %s21
          %p164 = scmp.lt.s32.totalorder %s19, 0
          %s165 = scalar_select %p164, %s19, 0
          %p166 = scmp.lt.s32.totalorder %s163, 3
          %s167 = scalar_select %p166, %s163, 3
          %s168 = smul.addr %s165, 4
          %s169 = sadd.s32 %s167, %s168
          %s170 = smul.addr %s169, 8
          %s171 = scalar_lea.vmem %s0, %s170
          %s172 = smul.u32 2, %s21
        $region20: #{binary_linear.1} parent=15 // pred_fallthru
          _
        // Predicated region
        $region21: #{binary_linear.1} parent=15 // pred_check
          %p173 = pneg %p81
        $region22: #{binary_linear.1} parent=15 // pred_check_branch
          %175 = sbr.rel (%p173) target = $region24
        $region23: #{binary_linear.1} parent=15 // pred_region
          %s176 = sand.u32 %s71, 1
          %s177 = sand.u32 %s71, 1
          %s178 = smul.addr %s177, 128
          %s179 = scalar_lea.vmem [#allocation3], %s178
          %s180 = smul.u32 32, %s21
          %s181 = smul.addr %s180, 2
          %s182 = sadd.s32 %s20, %s181
          %s183 = smul.addr %s182, 4
          %s184 = scalar_lea.vmem %s1, %s183
          // Predicated region
          $region25: #{binary_linear.1} parent=23 // pred_check
            _
          $region26: #{binary_linear.1} parent=23 // pred_check_branch
            %186 = sbr.rel (0) target = $region28
          $region27: #{binary_linear.1} parent=23 // pred_region
            // Predicated region
            $region29: #{binary_linear.1} parent=27 // pred_check
              _
            $region30: #{binary_linear.1} parent=27 // pred_check_branch
              %188 = sbr.rel target = $region32
            $region31: #{binary_linear.1} parent=27 // pred_region
              // Predicated region
              $region44: #{binary_linear.1} parent=31 // pred_check
                _
              $region45: #{binary_linear.1} parent=31 // pred_check_branch
                %265 = sbr.rel (0) target = $region47
              $region46: #{binary_linear.1} parent=31 // pred_region
                loop: start=0, step=1, limit=1
                $region48: #{binary_linear.1} parent=46 // loop_pre_header
                  _
                $region49: #{binary_linear.1} parent=46 // loop_header
                  %s267 = sphi 0, %s271
                  %p268 = scmp.ge.s32.totalorder %s267, 1
                  %s272 = sphi %s184, %s184
                  %s273 = sphi %s179, %s179
                $region50: #{binary_linear.1} parent=46 // loop_header_branch
                  %270 = sbr.rel (%p268) target = $region54
                $region51: #{binary_linear.1} parent=46 // loop_body
                  _
                $region52: #{binary_linear.1} parent=46 // loop_footer
                  %s271 = sadd.s32 1, %s267
                $region53: #{binary_linear.1} parent=46 // loop_footer_branch
                  %266 = sbr.rel target = $region49
                $region54: #{binary_linear.1} parent=46 // loop_exit
                  _
                loop: start=0, step=1, limit=1
                $region55: #{binary_linear.1} parent=46 // loop_pre_header
                  _
                $region56: #{binary_linear.1} parent=46 // loop_header
                  %s276 = sphi 0, %s280
                  %p277 = scmp.ge.s32.totalorder %s276, 1
                  %s281 = sphi %s184, %s184
                  %s282 = sphi %s179, %s179
                $region57: #{binary_linear.1} parent=46 // loop_header_branch
                  %279 = sbr.rel (%p277) target = $region61
                $region58: #{binary_linear.1} parent=46 // loop_body
                  %v283 = vld [vmem:[%s281] sm:$0xf]
                  %284 = vst [vmem:[%s282] sm:$0xf] %v283
                  %v285 = vld [vmem:[%s281 + $0x8] sm:$0xf]
                  %286 = vst [vmem:[%s282 + $0x4] sm:$0xf] %v285
                  %v287 = vld [vmem:[%s281 + $0x10] sm:$0xf]
                  %288 = vst [vmem:[%s282 + $0x8] sm:$0xf] %v287
                  %v289 = vld [vmem:[%s281 + $0x18] sm:$0xf]
                  %290 = vst [vmem:[%s282 + $0xc] sm:$0xf] %v289
                  %v291 = vld [vmem:[%s281 + $0x20] sm:$0xf]
                  %292 = vst [vmem:[%s282 + $0x10] sm:$0xf] %v291
                  %v293 = vld [vmem:[%s281 + $0x28] sm:$0xf]
                  %294 = vst [vmem:[%s282 + $0x14] sm:$0xf] %v293
                  %v295 = vld [vmem:[%s281 + $0x30] sm:$0xf]
                  %296 = vst [vmem:[%s282 + $0x18] sm:$0xf] %v295
                  %v297 = vld [vmem:[%s281 + $0x38] sm:$0xf]
                  %298 = vst [vmem:[%s282 + $0x1c] sm:$0xf] %v297
                  %v299 = vld [vmem:[%s281 + $0x40] sm:$0xf]
                  %300 = vst [vmem:[%s282 + $0x20] sm:$0xf] %v299
                  %v301 = vld [vmem:[%s281 + $0x48] sm:$0xf]
                  %302 = vst [vmem:[%s282 + $0x24] sm:$0xf] %v301
                  %v303 = vld [vmem:[%s281 + $0x50] sm:$0xf]
                  %304 = vst [vmem:[%s282 + $0x28] sm:$0xf] %v303
                  %v305 = vld [vmem:[%s281 + $0x58] sm:$0xf]
                  %306 = vst [vmem:[%s282 + $0x2c] sm:$0xf] %v305
                  %v307 = vld [vmem:[%s281 + $0x60] sm:$0xf]
                  %308 = vst [vmem:[%s282 + $0x30] sm:$0xf] %v307
                  %v309 = vld [vmem:[%s281 + $0x68] sm:$0xf]
                  %310 = vst [vmem:[%s282 + $0x34] sm:$0xf] %v309
                  %v311 = vld [vmem:[%s281 + $0x70] sm:$0xf]
                  %312 = vst [vmem:[%s282 + $0x38] sm:$0xf] %v311
                  %v313 = vld [vmem:[%s281 + $0x78] sm:$0xf]
                  %314 = vst [vmem:[%s282 + $0x3c] sm:$0xf] %v313
                  %v315 = vld [vmem:[%s281 + $0x80] sm:$0xf]
                  %316 = vst [vmem:[%s282 + $0x40] sm:$0xf] %v315
                  %v317 = vld [vmem:[%s281 + $0x88] sm:$0xf]
                  %318 = vst [vmem:[%s282 + $0x44] sm:$0xf] %v317
                  %v319 = vld [vmem:[%s281 + $0x90] sm:$0xf]
                  %320 = vst [vmem:[%s282 + $0x48] sm:$0xf] %v319
                  %v321 = vld [vmem:[%s281 + $0x98] sm:$0xf]
                  %322 = vst [vmem:[%s282 + $0x4c] sm:$0xf] %v321
                  %v323 = vld [vmem:[%s281 + $0xa0] sm:$0xf]
                  %324 = vst [vmem:[%s282 + $0x50] sm:$0xf] %v323
                  %v325 = vld [vmem:[%s281 + $0xa8] sm:$0xf]
                  %326 = vst [vmem:[%s282 + $0x54] sm:$0xf] %v325
                  %v327 = vld [vmem:[%s281 + $0xb0] sm:$0xf]
                  %328 = vst [vmem:[%s282 + $0x58] sm:$0xf] %v327
                  %v329 = vld [vmem:[%s281 + $0xb8] sm:$0xf]
                  %330 = vst [vmem:[%s282 + $0x5c] sm:$0xf] %v329
                  %v331 = vld [vmem:[%s281 + $0xc0] sm:$0xf]
                  %332 = vst [vmem:[%s282 + $0x60] sm:$0xf] %v331
                  %v333 = vld [vmem:[%s281 + $0xc8] sm:$0xf]
                  %334 = vst [vmem:[%s282 + $0x64] sm:$0xf] %v333
                  %v335 = vld [vmem:[%s281 + $0xd0] sm:$0xf]
                  %336 = vst [vmem:[%s282 + $0x68] sm:$0xf] %v335
                  %v337 = vld [vmem:[%s281 + $0xd8] sm:$0xf]
                  %338 = vst [vmem:[%s282 + $0x6c] sm:$0xf] %v337
                  %v339 = vld [vmem:[%s281 + $0xe0] sm:$0xf]
                  %340 = vst [vmem:[%s282 + $0x70] sm:$0xf] %v339
                  %v341 = vld [vmem:[%s281 + $0xe8] sm:$0xf]
                  %342 = vst [vmem:[%s282 + $0x74] sm:$0xf] %v341
                  %v343 = vld [vmem:[%s281 + $0xf0] sm:$0xf]
                  %344 = vst [vmem:[%s282 + $0x78] sm:$0xf] %v343
                  %v345 = vld [vmem:[%s281 + $0xf8] sm:$0xf]
                  %346 = vst [vmem:[%s282 + $0x7c] sm:$0xf] %v345
                $region59: #{binary_linear.1} parent=46 // loop_footer
                  %s280 = sadd.s32 1, %s276
                $region60: #{binary_linear.1} parent=46 // loop_footer_branch
                  %275 = sbr.rel target = $region56
                $region61: #{binary_linear.1} parent=46 // loop_exit
                  _
              $region47: #{binary_linear.1} parent=31 // pred_fallthru
                _
            $region32: #{binary_linear.1} parent=27 // pred_fallthru
              _
            // Predicated region
            $region33: #{binary_linear.1} parent=27 // pred_check
              _
            $region34: #{binary_linear.1} parent=27 // pred_check_branch
              %190 = sbr.rel (0) target = $region36
            $region35: #{binary_linear.1} parent=27 // pred_region
              loop: start=0, step=1, limit=1
              $region37: #{binary_linear.1} parent=35 // loop_pre_header
                _
              $region38: #{binary_linear.1} parent=35 // loop_header
                %s193 = sphi 0, %s197
                %p194 = scmp.ge.s32.totalorder %s193, 1
                %s198 = sphi %s184, %s184
                %s199 = sphi %s179, %s179
              $region39: #{binary_linear.1} parent=35 // loop_header_branch
                %196 = sbr.rel (%p194) target = $region43
              $region40: #{binary_linear.1} parent=35 // loop_body
                %v200 = vld [vmem:[%s198] sm:$0xf]
                %201 = vst [vmem:[%s199] sm:$0xf] %v200
                %v202 = vld [vmem:[%s198 + $0x8] sm:$0xf]
                %203 = vst [vmem:[%s199 + $0x4] sm:$0xf] %v202
                %v204 = vld [vmem:[%s198 + $0x10] sm:$0xf]
                %205 = vst [vmem:[%s199 + $0x8] sm:$0xf] %v204
                %v206 = vld [vmem:[%s198 + $0x18] sm:$0xf]
                %207 = vst [vmem:[%s199 + $0xc] sm:$0xf] %v206
                %v208 = vld [vmem:[%s198 + $0x20] sm:$0xf]
                %209 = vst [vmem:[%s199 + $0x10] sm:$0xf] %v208
                %v210 = vld [vmem:[%s198 + $0x28] sm:$0xf]
                %211 = vst [vmem:[%s199 + $0x14] sm:$0xf] %v210
                %v212 = vld [vmem:[%s198 + $0x30] sm:$0xf]
                %213 = vst [vmem:[%s199 + $0x18] sm:$0xf] %v212
                %v214 = vld [vmem:[%s198 + $0x38] sm:$0xf]
                %215 = vst [vmem:[%s199 + $0x1c] sm:$0xf] %v214
                %v216 = vld [vmem:[%s198 + $0x40] sm:$0xf]
                %217 = vst [vmem:[%s199 + $0x20] sm:$0xf] %v216
                %v218 = vld [vmem:[%s198 + $0x48] sm:$0xf]
                %219 = vst [vmem:[%s199 + $0x24] sm:$0xf] %v218
                %v220 = vld [vmem:[%s198 + $0x50] sm:$0xf]
                %221 = vst [vmem:[%s199 + $0x28] sm:$0xf] %v220
                %v222 = vld [vmem:[%s198 + $0x58] sm:$0xf]
                %223 = vst [vmem:[%s199 + $0x2c] sm:$0xf] %v222
                %v224 = vld [vmem:[%s198 + $0x60] sm:$0xf]
                %225 = vst [vmem:[%s199 + $0x30] sm:$0xf] %v224
                %v226 = vld [vmem:[%s198 + $0x68] sm:$0xf]
                %227 = vst [vmem:[%s199 + $0x34] sm:$0xf] %v226
                %v228 = vld [vmem:[%s198 + $0x70] sm:$0xf]
                %229 = vst [vmem:[%s199 + $0x38] sm:$0xf] %v228
                %v230 = vld [vmem:[%s198 + $0x78] sm:$0xf]
                %231 = vst [vmem:[%s199 + $0x3c] sm:$0xf] %v230
                %v232 = vld [vmem:[%s198 + $0x80] sm:$0xf]
                %233 = vst [vmem:[%s199 + $0x40] sm:$0xf] %v232
                %v234 = vld [vmem:[%s198 + $0x88] sm:$0xf]
                %235 = vst [vmem:[%s199 + $0x44] sm:$0xf] %v234
                %v236 = vld [vmem:[%s198 + $0x90] sm:$0xf]
                %237 = vst [vmem:[%s199 + $0x48] sm:$0xf] %v236
                %v238 = vld [vmem:[%s198 + $0x98] sm:$0xf]
                %239 = vst [vmem:[%s199 + $0x4c] sm:$0xf] %v238
                %v240 = vld [vmem:[%s198 + $0xa0] sm:$0xf]
                %241 = vst [vmem:[%s199 + $0x50] sm:$0xf] %v240
                %v242 = vld [vmem:[%s198 + $0xa8] sm:$0xf]
                %243 = vst [vmem:[%s199 + $0x54] sm:$0xf] %v242
                %v244 = vld [vmem:[%s198 + $0xb0] sm:$0xf]
                %245 = vst [vmem:[%s199 + $0x58] sm:$0xf] %v244
                %v246 = vld [vmem:[%s198 + $0xb8] sm:$0xf]
                %247 = vst [vmem:[%s199 + $0x5c] sm:$0xf] %v246
                %v248 = vld [vmem:[%s198 + $0xc0] sm:$0xf]
                %249 = vst [vmem:[%s199 + $0x60] sm:$0xf] %v248
                %v250 = vld [vmem:[%s198 + $0xc8] sm:$0xf]
                %251 = vst [vmem:[%s199 + $0x64] sm:$0xf] %v250
                %v252 = vld [vmem:[%s198 + $0xd0] sm:$0xf]
                %253 = vst [vmem:[%s199 + $0x68] sm:$0xf] %v252
                %v254 = vld [vmem:[%s198 + $0xd8] sm:$0xf]
                %255 = vst [vmem:[%s199 + $0x6c] sm:$0xf] %v254
                %v256 = vld [vmem:[%s198 + $0xe0] sm:$0xf]
                %257 = vst [vmem:[%s199 + $0x70] sm:$0xf] %v256
                %v258 = vld [vmem:[%s198 + $0xe8] sm:$0xf]
                %259 = vst [vmem:[%s199 + $0x74] sm:$0xf] %v258
                %v260 = vld [vmem:[%s198 + $0xf0] sm:$0xf]
                %261 = vst [vmem:[%s199 + $0x78] sm:$0xf] %v260
                %v262 = vld [vmem:[%s198 + $0xf8] sm:$0xf]
                %263 = vst [vmem:[%s199 + $0x7c] sm:$0xf] %v262
              $region41: #{binary_linear.1} parent=35 // loop_footer
                %s197 = sadd.s32 1, %s193
              $region42: #{binary_linear.1} parent=35 // loop_footer_branch
                %192 = sbr.rel target = $region38
              $region43: #{binary_linear.1} parent=35 // loop_exit
                _
            $region36: #{binary_linear.1} parent=27 // pred_fallthru
              _
          $region28: #{binary_linear.1} parent=23 // pred_fallthru
            _
          %347 = vnop
        $region24: #{binary_linear.1} parent=15 // pred_fallthru
          _
        // Predicated region
        $region62: #{binary_linear.1} parent=15 // pred_check
          %p348 = pneg %p107
        $region63: #{binary_linear.1} parent=15 // pred_check_branch
          %350 = sbr.rel (%p348) target = $region65
        $region64: #{binary_linear.1} parent=15 // pred_region
          %p351 = scmp.lt.s32.totalorder %s20, 1
          %s352 = scalar_select %p351, %s20, 1
          %s353 = scalar_lea.vmem %s2, %s352
        $region65: #{binary_linear.1} parent=15 // pred_fallthru
          _
      $region16: #{binary_linear.1} parent=5 // pred_fallthru
        _
      %p354 = scmp.le.s32.totalorder 1, %s12
      %p355 = scmp.lt.s32.totalorder %s12, 5
      %p356 = pnand %p354, %p355
      %p357 = pneg %p356
      // Predicated region
      $region66: #{binary_linear.1} parent=5 // pred_check
        _
      $region67: #{binary_linear.1} parent=5 // pred_check_branch
        %359 = sbr.rel (%p356) target = $region69
      $region68: #{binary_linear.1} parent=5 // pred_region
        %s360 = ssub.s32 %s12, 1
        %s361 = sand.u32 %s74, 1
        %s362 = sand.u32 %s74, 1
        %s363 = smul.addr %s362, 128
        %s364 = scalar_lea.vmem [#allocation3], %s363
        // Predicated region
        $region70: #{binary_linear.1} parent=68 // pred_check
          %p365 = pneg %p87
        $region71: #{binary_linear.1} parent=68 // pred_check_branch
          %367 = sbr.rel (%p365) target = $region73
        $region72: #{binary_linear.1} parent=68 // pred_region
          _
        $region73: #{binary_linear.1} parent=68 // pred_fallthru
          _
        %s368 = smul.u32 2, %s24
        %p369 = scmp.lt.s32.totalorder %s22, 0
        %s370 = scalar_select %p369, %s22, 0
        %p371 = scmp.lt.s32.totalorder %s368, 3
        %s372 = scalar_select %p371, %s368, 3
        %s373 = smul.addr %s370, 4
        %s374 = sadd.s32 %s372, %s373
        %s375 = smul.addr %s374, 8
        %s376 = scalar_lea.vmem %s0, %s375
        %p377 = pneg %p59
        %p378 = pneg %p56
        %s379 = sand.u32 %s74, 1
        %s380 = sand.u32 %s74, 1
        %s381 = smul.addr %s380, 128
        %s382 = scalar_lea.vmem [#allocation3], %s381
        %p383 = pneg %p87
        %p384 = pneg %p84
        %p385 = scmp.lt.s32.totalorder %s23, 1
        %s386 = scalar_select %p385, %s23, 1
        %s387 = scalar_lea.vmem %s2, %s386
        %p388 = pneg %p113
        %p389 = pneg %p110
        %p390 = pneg %p141
        %p391 = pneg %p138
        %s392 = sand.u32 %s128, 1
        %s393 = scalar_lea.sflag [#allocation5], %s392
        %s394 = sand.u32 %s128, 1
        %s395 = smul.addr %s394, 8
        %s396 = scalar_lea.vmem [#allocation4], %s395
        %s397 = smul.u32 2, %s24
        %p398 = scmp.lt.s32.totalorder %s22, 0
        %s399 = scalar_select %p398, %s22, 0
        %p400 = scmp.lt.s32.totalorder %s397, 3
        %s401 = scalar_select %p400, %s397, 3
        %s402 = smul.addr %s399, 4
        %s403 = sadd.s32 %s401, %s402
        %s404 = smul.addr %s403, 8
        %s405 = scalar_lea.vmem %s0, %s404
        %s406 = smul.u32 2, %s24
        %s407 = smul.u32 32, %s24
        %p408 = scmp.lt.s32.totalorder %s23, 1
        %s409 = scalar_select %p408, %s23, 1
        %s410 = scalar_lea.vmem %s2, %s409
        %p412 = scmp.eq.s32.totalorder %s24, 0
        // Predicated region
        $region74: #{binary_linear.1} parent=68 // pred_check
          %p413 = pneg %p412
        $region75: #{binary_linear.1} parent=68 // pred_check_branch
          %415 = sbr.rel (%p413) target = $region77
        $region76: #{binary_linear.1} parent=68 // pred_region
          %416 = vst [vmem:[#allocation2] sm:$0xff] 0.0
        $region77: #{binary_linear.1} parent=68 // pred_fallthru
          _
        %v417 = vld [vmem:[%s405] sm:$0xff]
        %v418 = vld [vmem:[%s405 + $0x8] sm:$0xff]
        %vm419 = vcmp.gt.f32.partialorder %v417, 0.0
        %vm420 = vcmp.gt.f32.partialorder %v418, 0.0
        %v421 = vsel %vm419, 1.0, -1.0
        %v422 = vsel %vm420, 1.0, -1.0
        %v423 = vpack.c.bf16 %v421, %v421
        %v424 = vpack.c.bf16 %v422, %v422
        %v425 = vld [vmem:[#allocation2] sm:$0xff]
        %v426 = vld [vmem:[%s364] sm:$0xf]
        %v427 = vld [vmem:[%s364 + $0x4] sm:$0xf]
        %v428 = vld [vmem:[%s364 + $0x8] sm:$0xf]
        %v429 = vld [vmem:[%s364 + $0xc] sm:$0xf]
        %v430 = vld [vmem:[%s364 + $0x10] sm:$0xf]
        %v431 = vld [vmem:[%s364 + $0x14] sm:$0xf]
        %v432 = vld [vmem:[%s364 + $0x18] sm:$0xf]
        %v433 = vld [vmem:[%s364 + $0x1c] sm:$0xf]
        %v434 = vld [vmem:[%s364 + $0x20] sm:$0xf]
        %v435 = vld [vmem:[%s364 + $0x24] sm:$0xf]
        %v436 = vld [vmem:[%s364 + $0x28] sm:$0xf]
        %v437 = vld [vmem:[%s364 + $0x2c] sm:$0xf]
        %v438 = vld [vmem:[%s364 + $0x30] sm:$0xf]
        %v439 = vld [vmem:[%s364 + $0x34] sm:$0xf]
        %v440 = vld [vmem:[%s364 + $0x38] sm:$0xf]
        %v441 = vld [vmem:[%s364 + $0x3c] sm:$0xf]
        %v442 = vld [vmem:[%s364 + $0x40] sm:$0xf]
        %v443 = vld [vmem:[%s364 + $0x44] sm:$0xf]
        %v444 = vld [vmem:[%s364 + $0x48] sm:$0xf]
        %v445 = vld [vmem:[%s364 + $0x4c] sm:$0xf]
        %v446 = vld [vmem:[%s364 + $0x50] sm:$0xf]
        %v447 = vld [vmem:[%s364 + $0x54] sm:$0xf]
        %v448 = vld [vmem:[%s364 + $0x58] sm:$0xf]
        %v449 = vld [vmem:[%s364 + $0x5c] sm:$0xf]
        %v450 = vld [vmem:[%s364 + $0x60] sm:$0xf]
        %v451 = vld [vmem:[%s364 + $0x64] sm:$0xf]
        %v452 = vld [vmem:[%s364 + $0x68] sm:$0xf]
        %v453 = vld [vmem:[%s364 + $0x6c] sm:$0xf]
        %v454 = vld [vmem:[%s364 + $0x70] sm:$0xf]
        %v455 = vld [vmem:[%s364 + $0x74] sm:$0xf]
        %v456 = vld [vmem:[%s364 + $0x78] sm:$0xf]
        %v457 = vld [vmem:[%s364 + $0x7c] sm:$0xf]
        %v490 = vunpack.c.l.b16 %v426
        %v491 = vunpack.c.l.b16 %v427
        %v492 = vunpack.c.l.b16 %v428
        %v493 = vunpack.c.l.b16 %v429
        %v494 = vunpack.c.l.b16 %v430
        %v495 = vunpack.c.l.b16 %v431
        %v496 = vunpack.c.l.b16 %v432
        %v497 = vunpack.c.l.b16 %v433
        %v498 = vunpack.c.l.b16 %v434
        %v499 = vunpack.c.l.b16 %v435
        %v500 = vunpack.c.l.b16 %v436
        %v501 = vunpack.c.l.b16 %v437
        %v502 = vunpack.c.l.b16 %v438
        %v503 = vunpack.c.l.b16 %v439
        %v504 = vunpack.c.l.b16 %v440
        %v505 = vunpack.c.l.b16 %v441
        %v506 = vunpack.c.l.b16 %v442
        %v507 = vunpack.c.l.b16 %v443
        %v508 = vunpack.c.l.b16 %v444
        %v509 = vunpack.c.l.b16 %v445
        %v510 = vunpack.c.l.b16 %v446
        %v511 = vunpack.c.l.b16 %v447
        %v512 = vunpack.c.l.b16 %v448
        %v513 = vunpack.c.l.b16 %v449
        %v514 = vunpack.c.l.b16 %v450
        %v515 = vunpack.c.l.b16 %v451
        %v516 = vunpack.c.l.b16 %v452
        %v517 = vunpack.c.l.b16 %v453
        %v518 = vunpack.c.l.b16 %v454
        %v519 = vunpack.c.l.b16 %v455
        %v520 = vunpack.c.l.b16 %v456
        %v521 = vunpack.c.l.b16 %v457
        %v522 = vpack.c.b16 %v491, %v490
        %v523 = vpack.c.b16 %v493, %v492
        %v524 = vpack.c.b16 %v495, %v494
        %v525 = vpack.c.b16 %v497, %v496
        %v526 = vpack.c.b16 %v499, %v498
        %v527 = vpack.c.b16 %v501, %v500
        %v528 = vpack.c.b16 %v503, %v502
        %v529 = vpack.c.b16 %v505, %v504
        %v530 = vpack.c.b16 %v507, %v506
        %v531 = vpack.c.b16 %v509, %v508
        %v532 = vpack.c.b16 %v511, %v510
        %v533 = vpack.c.b16 %v513, %v512
        %v534 = vpack.c.b16 %v515, %v514
        %v535 = vpack.c.b16 %v517, %v516
        %v536 = vpack.c.b16 %v519, %v518
        %v537 = vpack.c.b16 %v521, %v520
        %554 = vmatprep.subr.bf16.mxu0 0
        %555 = vmatpush1.bf16.msra.mxu0 %v522
        %556 = vmatprep.subr.bf16.mxu0 0
        %557 = vmatpush1.bf16.msra.mxu0 %v523
        %558 = vmatprep.subr.bf16.mxu0 0
        %559 = vmatpush1.bf16.msra.mxu0 %v524
        %560 = vmatprep.subr.bf16.mxu0 0
        %561 = vmatpush1.bf16.msra.mxu0 %v525
        %562 = vmatprep.subr.bf16.mxu0 0
        %563 = vmatpush1.bf16.msra.mxu0 %v526
        %564 = vmatprep.subr.bf16.mxu0 0
        %565 = vmatpush1.bf16.msra.mxu0 %v527
        %566 = vmatprep.subr.bf16.mxu0 0
        %567 = vmatpush1.bf16.msra.mxu0 %v528
        %568 = vmatprep.subr.bf16.mxu0 0
        %569 = vmatpush1.bf16.msra.mxu0 %v529
        %570 = vmatprep.subr.bf16.mxu0 0
        %571 = vmatpush1.bf16.msra.mxu0 %v530
        %572 = vmatprep.subr.bf16.mxu0 0
        %573 = vmatpush1.bf16.msra.mxu0 %v531
        %574 = vmatprep.subr.bf16.mxu0 0
        %575 = vmatpush1.bf16.msra.mxu0 %v532
        %576 = vmatprep.subr.bf16.mxu0 0
        %577 = vmatpush1.bf16.msra.mxu0 %v533
        %578 = vmatprep.subr.bf16.mxu0 0
        %579 = vmatpush1.bf16.msra.mxu0 %v534
        %580 = vmatprep.subr.bf16.mxu0 0
        %581 = vmatpush1.bf16.msra.mxu0 %v535
        %582 = vmatprep.subr.bf16.mxu0 0
        %583 = vmatpush1.bf16.msra.mxu0 %v536
        %584 = vmatprep.subr.bf16.mxu0 0
        %585 = vmatpush1.bf16.msra.mxu0 %v537
        %586 = vmatprep.mubr.bf16.mxu0 %v424
        %587 = vmatmul.mubr.bf16.gmra.mrb[0].mxu0 %v423
        %v588 = vpop.f32.mrb[0].mxu0
        %v589 = vadd.f32 0.0, %v588
        %v590 = vpop.f32.mrb[0].mxu0
        %v591 = vpop.f32.mrb[0].mxu0
        %v592 = vpop.f32.mrb[0].mxu0
        %593 = vdwg.mxu0
        %v594 = vadd.f32 %v425, %v589
        %595 = vst [vmem:[#allocation2] sm:$0xff] %v594
        %p596 = scmp.eq.s32.totalorder %s24, 1
        // Predicated region
        $region78: #{binary_linear.1} parent=68 // pred_check
          %p597 = pneg %p596
        $region79: #{binary_linear.1} parent=68 // pred_check_branch
          %599 = sbr.rel (%p597) target = $region81
        $region80: #{binary_linear.1} parent=68 // pred_region
          %v600 = vld [vmem:[#allocation2] sm:$0xff]
          %v601 = vld [vmem:[%s410] sm:$0x1]
          %v603 = vlaneseq
          %v604 = vshrl.u32 %v603, 7
          %v605 = vsub.s32 0, %v604
          %v606 = vrot.slane %v601, %v605
          %v608 = vadd.f32 %v600, %v606
          %609 = vst [vmem:[%s396] sm:$0xff] %v608
        $region81: #{binary_linear.1} parent=68 // pred_fallthru
          _
        %s610 = sand.u32 %s128, 1
        %s611 = scalar_lea.sflag [#allocation5], %s610
        %s612 = sand.u32 %s128, 1
        %s613 = smul.addr %s612, 8
        %s614 = scalar_lea.vmem [#allocation4], %s613
        // Predicated region
        $region82: #{binary_linear.1} parent=68 // pred_check
          %p615 = pneg %p138
        $region83: #{binary_linear.1} parent=68 // pred_check_branch
          %617 = sbr.rel (%p615) target = $region85
        $region84: #{binary_linear.1} parent=68 // pred_region
          %s619 = ssub.s32 128, 128
          %620 = vsyncadd %s611, %s619
          %s621 = smul.addr %s22, 2
          %s622 = sadd.s32 %s23, %s621
          %s623 = smul.addr %s622, 128
          %s624 = scalar_lea.hbm %s3, %s623
          %s626 = sshll.u32 %s614, 4
          %s627 = int_to_ptr.vmem [resolvable:$true] %s626
          %629 = dma.vmem_to_hbm [thread:$0]  %s627, 128, %s624, %s611
        $region85: #{binary_linear.1} parent=68 // pred_fallthru
          _
      $region69: #{binary_linear.1} parent=5 // pred_fallthru
        _
      %p630 = scmp.le.s32.totalorder 2, %s12
      // Predicated region
      $region86: #{binary_linear.1} parent=5 // pred_check
        %p631 = pneg %p630
      $region87: #{binary_linear.1} parent=5 // pred_check_branch
        %633 = sbr.rel (%p631) target = $region89
      $region88: #{binary_linear.1} parent=5 // pred_region
        %s634 = ssub.s32 %s12, 2
        // Predicated region
        $region90: #{binary_linear.1} parent=88 // pred_check
          %p635 = pneg %p144
        $region91: #{binary_linear.1} parent=88 // pred_check_branch
          %637 = sbr.rel (%p635) target = $region93
        $region92: #{binary_linear.1} parent=88 // pred_region
          %s638 = sand.u32 %s129, 1
          %s639 = scalar_lea.sflag [#allocation5], %s638
          %s640 = sand.u32 %s129, 1
          %s641 = smul.addr %s640, 8
          %s642 = scalar_lea.vmem [#allocation4], %s641
          %643 = dma.done %s639, 128
        $region93: #{binary_linear.1} parent=88 // pred_fallthru
          _
      $region89: #{binary_linear.1} parent=5 // pred_fallthru
        _
    $region6: #{binary_linear.1} parent=1 // loop_footer
      %s16 = sadd.s32 1, %s12
    $region7: #{binary_linear.1} parent=1 // loop_footer_branch
      %11 = sbr.rel target = $region3
    $region8: #{binary_linear.1} parent=1 // loop_exit
      _
    %644 = vsyncpa [#allocation5], 1
    %s645 = scalar_lea.sflag [#allocation5], 1
    %646 = vsyncpa %s645, 1

</llo_original>
